<compile_context>
chip_gen: v7x
topology: tpu7x:2x2x1
jax: 0.10.0
libtpu: 0.0.40
codegen_flags: <defaults>
</compile_context>

<pallas_src>
import jax
import jax.numpy as jnp
from jax.experimental import pallas as pl
from jax.experimental.pallas import tpu as pltpu

GRID_SIZE = 10
IN_DIM = GRID_SIZE * GRID_SIZE  # 100
H1 = 128
H2 = 64
OUT_DIM = 4
MAX_TB = 1024  # batch tile: bf16 x tile is only ~200 KiB -> cheap double-buffering


def dqn_kernel(x_ref, w1_ref, b1_ref, w2_ref, b2_ref, w3_ref, b3_ref, o_ref):
    # Layer 1: Linear(100 -> 128) + ReLU   (bf16 MXU operands, f32 accumulation)
    h1 = jnp.dot(x_ref[...], w1_ref[...], preferred_element_type=jnp.float32)
    h1 = jnp.maximum(h1 + b1_ref[...], 0.0)          # f32 VPU epilogue
    # Layer 2: Linear(128 -> 64) + ReLU
    h2 = jnp.dot(h1.astype(jnp.bfloat16), w2_ref[...],
                 preferred_element_type=jnp.float32)
    h2 = jnp.maximum(h2 + b2_ref[...], 0.0)
    # Layer 3: Linear(64 -> 4), no activation; single store per tile.
    out = jnp.dot(h2.astype(jnp.bfloat16), w3_ref[...],
                  preferred_element_type=jnp.float32)
    o_ref[...] = (out + b3_ref[...]).astype(o_ref.dtype)


def _round_up(n, m):
    return ((n + m - 1) // m) * m


def dqn_forward(x, params):
    """x: (B, 100) float32. Returns (B, 4) float32 Q-values."""
    B = x.shape[0]
    TB = min(MAX_TB, _round_up(max(B, 1), 8))   # multiple of 8, capped at 1024
    B_pad = _round_up(B, TB)

    # Cast the streamed operand + weights to bf16 at the boundary (halves HBM bytes,
    # native MXU datapath); biases stay f32 for the f32 VPU epilogue.
    x_bf16 = x.astype(jnp.bfloat16)
    if B_pad != B:
        x_bf16 = jnp.pad(x_bf16, ((0, B_pad - B), (0, 0)))

    w1 = params["w1"].astype(jnp.bfloat16)
    w2 = params["w2"].astype(jnp.bfloat16)
    w3 = params["w3"].astype(jnp.bfloat16)
    b1 = params["b1"].astype(jnp.float32)
    b2 = params["b2"].astype(jnp.float32)
    b3 = params["b3"].astype(jnp.float32)

    # Whole-array, grid-invariant blocks -> fetched once, VMEM-resident across tiles.
    resident = lambda a: pl.BlockSpec(a.shape, lambda i: (0,) * a.ndim)

    out = pl.pallas_call(
        dqn_kernel,
        out_shape=jax.ShapeDtypeStruct((B_pad, OUT_DIM), jnp.float32),
        grid=(B_pad // TB,),
        in_specs=[
            pl.BlockSpec((TB, IN_DIM), lambda i: (i, 0)),   # x: streamed & pipelined
            resident(w1), resident(b1),
            resident(w2), resident(b2),
            resident(w3), resident(b3),
        ],
        out_specs=pl.BlockSpec((TB, OUT_DIM), lambda i: (i, 0)),
        compiler_params=pltpu.CompilerParams(
            dimension_semantics=("parallel",)),  # megacore sharding on v7x
    )(x_bf16, w1, b1, w2, b2, w3, b3)
    return out[:B]


def init_params(key):
    """Deterministic init mimicking PyTorch's default Linear init:
    U(-1/sqrt(fan_in), 1/sqrt(fan_in)). Weights stored as (in, out)."""
    def linear(key, fan_in, fan_out):
        kw, kb = jax.random.split(key)
        bound = 1.0 / jnp.sqrt(fan_in)
        w = jax.random.uniform(kw, (fan_in, fan_out), jnp.float32, -bound, bound)
        b = jax.random.uniform(kb, (1, fan_out), jnp.float32, -bound, bound)
        return w, b

    k1, k2, k3 = jax.random.split(key, 3)
    w1, b1 = linear(k1, IN_DIM, H1)
    w2, b2 = linear(k2, H1, H2)
    w3, b3 = linear(k3, H2, OUT_DIM)
    return {"w1": w1, "b1": b1, "w2": w2, "b2": b2, "w3": w3, "b3": b3}


def dqn_reference_bf16(x, params):
    """Pure-JAX reference mirroring the kernel's bf16-operand / f32-accum math."""
    bf = jnp.bfloat16
    h = jnp.dot(x.astype(bf), params["w1"].astype(bf),
                preferred_element_type=jnp.float32)
    h = jnp.maximum(h + params["b1"], 0.0)
    h = jnp.dot(h.astype(bf), params["w2"].astype(bf),
                preferred_element_type=jnp.float32)
    h = jnp.maximum(h + params["b2"], 0.0)
    out = jnp.dot(h.astype(bf), params["w3"].astype(bf),
                  preferred_element_type=jnp.float32)
    return out + params["b3"]


def dqn_reference_f32(x, params):
    """Full-precision reference (loose sanity check for the bf16 cast)."""
    h = jnp.maximum(x @ params["w1"] + params["b1"], 0.0)
    h = jnp.maximum(h @ params["w2"] + params["b2"], 0.0)
    return h @ params["w3"] + params["b3"]


if __name__ == "__main__":
    key = jax.random.PRNGKey(0)
    kp, kx1, kx2 = jax.random.split(key, 3)
    params = init_params(kp)

    # Small demo batch (flattened 10x10 grid state).
    batch = 2
    x = jax.random.uniform(kx1, (batch, IN_DIM), jnp.float32)
    out = jax.block_until_ready(dqn_forward(x, params))
    assert out.shape == (batch, OUT_DIM)
    ref = dqn_reference_bf16(x, params)
    assert jnp.allclose(out, ref, atol=1e-2, rtol=1e-2)
    assert jnp.allclose(out, dqn_reference_f32(x, params), atol=5e-2, rtol=5e-2)

    # Exercise padding + multi-tile grid (batch not a multiple of the tile).
    batch2 = 300
    x2 = jax.random.uniform(kx2, (batch2, IN_DIM), jnp.float32)
    out2 = jax.block_until_ready(dqn_forward(x2, params))
    assert out2.shape == (batch2, OUT_DIM)
    ref2 = dqn_reference_bf16(x2, params)
    assert jnp.allclose(out2, ref2, atol=1e-2, rtol=1e-2)

    print("KERNEL_OK")
</pallas_src>

<mosaic_0001>
module attributes {stable_mosaic.version = 11 : i64} {
  func.func @dqn_kernel(%arg0: i32, %arg1: memref<8x100xbf16, #tpu.memory_space<vmem>>, %arg2: memref<100x128xbf16, #tpu.memory_space<vmem>>, %arg3: memref<1x128xf32, #tpu.memory_space<vmem>>, %arg4: memref<128x64xbf16, #tpu.memory_space<vmem>>, %arg5: memref<1x64xf32, #tpu.memory_space<vmem>>, %arg6: memref<64x4xbf16, #tpu.memory_space<vmem>>, %arg7: memref<1x4xf32, #tpu.memory_space<vmem>>, %arg8: memref<8x4xf32, #tpu.memory_space<vmem>>) attributes {dimension_semantics = [#tpu.dimension_semantics<parallel>], iteration_bounds = array<i64: 1>, scalar_prefetch = 0 : i64, scratch_operands = 0 : i64, tpu.core_type = #tpu.core_type<tc>, window_params = [{transform_indices = @transform_0, window_bounds = array<i64: 8, 100>}, {pipeline_mode = #tpu.pipeline_mode<synchronous>, transform_indices = @transform_1, window_bounds = array<i64: 100, 128>}, {pipeline_mode = #tpu.pipeline_mode<synchronous>, transform_indices = @transform_2, window_bounds = array<i64: 1, 128>}, {pipeline_mode = #tpu.pipeline_mode<synchronous>, transform_indices = @transform_3, window_bounds = array<i64: 128, 64>}, {pipeline_mode = #tpu.pipeline_mode<synchronous>, transform_indices = @transform_4, window_bounds = array<i64: 1, 64>}, {pipeline_mode = #tpu.pipeline_mode<synchronous>, transform_indices = @transform_5, window_bounds = array<i64: 64, 4>}, {pipeline_mode = #tpu.pipeline_mode<synchronous>, transform_indices = @transform_6, window_bounds = array<i64: 1, 4>}, {transform_indices = @transform_7, window_bounds = array<i64: 8, 4>}]} {
    %c0 = arith.constant 0 : index
    %c0_0 = arith.constant 0 : index
    %0 = vector.load %arg1[%c0, %c0_0] : memref<8x100xbf16, #tpu.memory_space<vmem>>, vector<8x100xbf16>
    %c0_1 = arith.constant 0 : index
    %c0_2 = arith.constant 0 : index
    %1 = vector.load %arg2[%c0_1, %c0_2] : memref<100x128xbf16, #tpu.memory_space<vmem>>, vector<100x128xbf16>
    %cst = arith.constant dense<0.000000e+00> : vector<8x128xf32>
    %2 = tpu.matmul %0, %1, %cst {dimension_numbers = #tpu.dot_dimension_numbers<[1], [0], [0], [1], [0, 0, 1, 1], [], []>} : vector<8x100xbf16>, vector<100x128xbf16>, vector<8x128xf32> -> vector<8x128xf32>
    %c0_3 = arith.constant 0 : index
    %c0_4 = arith.constant 0 : index
    %3 = vector.load %arg3[%c0_3, %c0_4] : memref<1x128xf32, #tpu.memory_space<vmem>>, vector<1x128xf32>
    %4 = vector.broadcast %3 : vector<1x128xf32> to vector<8x128xf32>
    %5 = arith.addf %2, %4 : vector<8x128xf32>
    %cst_5 = arith.constant 0.000000e+00 : f32
    %6 = vector.broadcast %cst_5 : f32 to vector<8x128xf32>
    %7 = arith.maximumf %5, %6 : vector<8x128xf32>
    %8 = arith.truncf %7 : vector<8x128xf32> to vector<8x128xbf16>
    %c0_6 = arith.constant 0 : index
    %c0_7 = arith.constant 0 : index
    %9 = vector.load %arg4[%c0_6, %c0_7] : memref<128x64xbf16, #tpu.memory_space<vmem>>, vector<128x64xbf16>
    %cst_8 = arith.constant dense<0.000000e+00> : vector<8x64xf32>
    %10 = tpu.matmul %8, %9, %cst_8 {dimension_numbers = #tpu.dot_dimension_numbers<[1], [0], [0], [1], [0, 0, 1, 1], [], []>} : vector<8x128xbf16>, vector<128x64xbf16>, vector<8x64xf32> -> vector<8x64xf32>
    %c0_9 = arith.constant 0 : index
    %c0_10 = arith.constant 0 : index
    %11 = vector.load %arg5[%c0_9, %c0_10] : memref<1x64xf32, #tpu.memory_space<vmem>>, vector<1x64xf32>
    %12 = vector.broadcast %11 : vector<1x64xf32> to vector<8x64xf32>
    %13 = arith.addf %10, %12 : vector<8x64xf32>
    %cst_11 = arith.constant 0.000000e+00 : f32
    %14 = vector.broadcast %cst_11 : f32 to vector<8x64xf32>
    %15 = arith.maximumf %13, %14 : vector<8x64xf32>
    %16 = arith.truncf %15 : vector<8x64xf32> to vector<8x64xbf16>
    %c0_12 = arith.constant 0 : index
    %c0_13 = arith.constant 0 : index
    %17 = vector.load %arg6[%c0_12, %c0_13] : memref<64x4xbf16, #tpu.memory_space<vmem>>, vector<64x4xbf16>
    %cst_14 = arith.constant dense<0.000000e+00> : vector<8x4xf32>
    %18 = tpu.matmul %16, %17, %cst_14 {dimension_numbers = #tpu.dot_dimension_numbers<[1], [0], [0], [1], [0, 0, 1, 1], [], []>} : vector<8x64xbf16>, vector<64x4xbf16>, vector<8x4xf32> -> vector<8x4xf32>
    %c0_15 = arith.constant 0 : index
    %c0_16 = arith.constant 0 : index
    %19 = vector.load %arg7[%c0_15, %c0_16] : memref<1x4xf32, #tpu.memory_space<vmem>>, vector<1x4xf32>
    %20 = vector.broadcast %19 : vector<1x4xf32> to vector<8x4xf32>
    %21 = arith.addf %18, %20 : vector<8x4xf32>
    %c0_17 = arith.constant 0 : index
    %c0_18 = arith.constant 0 : index
    %22 = vector.load %arg8[%c0_17, %c0_18] : memref<8x4xf32, #tpu.memory_space<vmem>>, vector<8x4xf32>
    tpu.vector_store %arg8[%c0_17, %c0_18], %21 {strides = array<i32>} : memref<8x4xf32, #tpu.memory_space<vmem>>, vector<8x4xf32>,
    return
  }
  func.func @transform_0(%arg0: i32) -> (i32, i32) {
    %c0_i32 = arith.constant 0 : i32
    %c0_i32_0 = arith.constant 0 : i32
    return %arg0, %c0_i32 : i32, i32
  }
  func.func @transform_1(%arg0: i32) -> (i32, i32) {
    %c0_i32 = arith.constant 0 : i32
    %c0_i32_0 = arith.constant 0 : i32
    %c0_i32_1 = arith.constant 0 : i32
    return %c0_i32, %c0_i32_0 : i32, i32
  }
  func.func @transform_2(%arg0: i32) -> (i32, i32) {
    %c0_i32 = arith.constant 0 : i32
    %c0_i32_0 = arith.constant 0 : i32
    %c0_i32_1 = arith.constant 0 : i32
    return %c0_i32, %c0_i32_0 : i32, i32
  }
  func.func @transform_3(%arg0: i32) -> (i32, i32) {
    %c0_i32 = arith.constant 0 : i32
    %c0_i32_0 = arith.constant 0 : i32
    %c0_i32_1 = arith.constant 0 : i32
    return %c0_i32, %c0_i32_0 : i32, i32
  }
  func.func @transform_4(%arg0: i32) -> (i32, i32) {
    %c0_i32 = arith.constant 0 : i32
    %c0_i32_0 = arith.constant 0 : i32
    %c0_i32_1 = arith.constant 0 : i32
    return %c0_i32, %c0_i32_0 : i32, i32
  }
  func.func @transform_5(%arg0: i32) -> (i32, i32) {
    %c0_i32 = arith.constant 0 : i32
    %c0_i32_0 = arith.constant 0 : i32
    %c0_i32_1 = arith.constant 0 : i32
    return %c0_i32, %c0_i32_0 : i32, i32
  }
  func.func @transform_6(%arg0: i32) -> (i32, i32) {
    %c0_i32 = arith.constant 0 : i32
    %c0_i32_0 = arith.constant 0 : i32
    %c0_i32_1 = arith.constant 0 : i32
    return %c0_i32, %c0_i32_0 : i32, i32
  }
  func.func @transform_7(%arg0: i32) -> (i32, i32) {
    %c0_i32 = arith.constant 0 : i32
    %c0_i32_0 = arith.constant 0 : i32
    return %arg0, %c0_i32 : i32, i32
  }
}

</mosaic_0001>

<llo_original>
// kernel: tpu_custom_call.1
$region0: #{tpu_custom_call.1}
  #allocation0 [shape = 'u32[]', space=smem, size = 0x4, offset = 0x4, fixed_abs, tag = 'smem constant byte address 0x4 - core index']
  #allocation1 [shape = 'u32[144,128]{1,0:T(1,128)}', space=vmem, size = 0x12000, scoped, tag = 'internal scratch']
  %s0 = inlined_call_operand.vmem [shape: bf16[8,100], index: 0, kind: input, shape index: {}]
  %s1 = inlined_call_operand.vmem [shape: bf16[100,128], index: 1, kind: input, shape index: {}]
  %s2 = inlined_call_operand.vmem [shape: f32[1,128], index: 2, kind: input, shape index: {}]
  %s3 = inlined_call_operand.vmem [shape: bf16[128,64], index: 3, kind: input, shape index: {}]
  %s4 = inlined_call_operand.vmem [shape: f32[1,64], index: 4, kind: input, shape index: {}]
  %s5 = inlined_call_operand.vmem [shape: bf16[64,4], index: 5, kind: input, shape index: {}]
  %s6 = inlined_call_operand.vmem [shape: f32[1,4], index: 6, kind: input, shape index: {}]
  %s7 = inlined_call_operand.vmem [shape: f32[8,4], index: 7, kind: output, shape index: {}]
  %s8 = sld [smem:[#allocation0]]
  $region38: #{tpu_custom_call.1} parent=0
    _
  %s10 = ssub.s32 1, %s8
  %s11 = scalar_select 0, %s10, %s8
  // Predicated region
  $region2: #{tpu_custom_call.1} parent=0 // pred_check
    _
  $region3: #{tpu_custom_call.1} parent=0 // pred_check_branch
    %13 = sbr.rel (0) target = $region5
  $region4: #{tpu_custom_call.1} parent=0 // pred_region
    _
  $region5: #{tpu_custom_call.1} parent=0 // pred_fallthru
    _
  // Predicated region
  $region6: #{tpu_custom_call.1} parent=0 // pred_check
    _
  $region7: #{tpu_custom_call.1} parent=0 // pred_check_branch
    %15 = sbr.rel (0) target = $region9
  $region8: #{tpu_custom_call.1} parent=0 // pred_region
    _
  $region9: #{tpu_custom_call.1} parent=0 // pred_fallthru
    _
  // Predicated region
  $region10: #{tpu_custom_call.1} parent=0 // pred_check
    _
  $region11: #{tpu_custom_call.1} parent=0 // pred_check_branch
    %17 = sbr.rel (0) target = $region13
  $region12: #{tpu_custom_call.1} parent=0 // pred_region
    _
  $region13: #{tpu_custom_call.1} parent=0 // pred_fallthru
    _
  // Predicated region
  $region14: #{tpu_custom_call.1} parent=0 // pred_check
    _
  $region15: #{tpu_custom_call.1} parent=0 // pred_check_branch
    %19 = sbr.rel (0) target = $region17
  $region16: #{tpu_custom_call.1} parent=0 // pred_region
    _
  $region17: #{tpu_custom_call.1} parent=0 // pred_fallthru
    _
  // Predicated region
  $region18: #{tpu_custom_call.1} parent=0 // pred_check
    _
  $region19: #{tpu_custom_call.1} parent=0 // pred_check_branch
    %21 = sbr.rel (0) target = $region21
  $region20: #{tpu_custom_call.1} parent=0 // pred_region
    _
  $region21: #{tpu_custom_call.1} parent=0 // pred_fallthru
    _
  // Predicated region
  $region22: #{tpu_custom_call.1} parent=0 // pred_check
    _
  $region23: #{tpu_custom_call.1} parent=0 // pred_check_branch
    %23 = sbr.rel (0) target = $region25
  $region24: #{tpu_custom_call.1} parent=0 // pred_region
    _
  $region25: #{tpu_custom_call.1} parent=0 // pred_fallthru
    _
  // Predicated region
  $region26: #{tpu_custom_call.1} parent=0 // pred_check
    _
  $region27: #{tpu_custom_call.1} parent=0 // pred_check_branch
    %25 = sbr.rel (0) target = $region29
  $region28: #{tpu_custom_call.1} parent=0 // pred_region
    _
  $region29: #{tpu_custom_call.1} parent=0 // pred_fallthru
    _
  %v27 = vld [vmem:[%s0] sm:$0xf]
  %v28 = vld [vmem:[%s1] sm:$0xf]
  %v29 = vld [vmem:[%s1 + $0x4] sm:$0xf]
  %v30 = vld [vmem:[%s1 + $0x8] sm:$0xf]
  %v31 = vld [vmem:[%s1 + $0xc] sm:$0xf]
  %v32 = vld [vmem:[%s1 + $0x10] sm:$0xf]
  %v33 = vld [vmem:[%s1 + $0x14] sm:$0xf]
  %v34 = vld [vmem:[%s1 + $0x18] sm:$0xf]
  %v35 = vld [vmem:[%s1 + $0x1c] sm:$0xf]
  %v36 = vld [vmem:[%s1 + $0x20] sm:$0xf]
  %v37 = vld [vmem:[%s1 + $0x24] sm:$0xf]
  %v38 = vld [vmem:[%s1 + $0x28] sm:$0xf]
  %v39 = vld [vmem:[%s1 + $0x2c] sm:$0xf]
  %v40 = vld [vmem:[%s1 + $0x30] sm:$0x3]
  %v41 = vld [vmem:[%s2] sm:$0x1]
  %v43 = vlaneseq
  %v44 = vshrl.u32 %v43, 7
  %v45 = vsub.s32 0, %v44
  %v46 = vrot.slane %v41, %v45
  %v61 = vunpack.c.l.b16 %v28
  %v62 = vunpack.c.l.b16 %v29
  %v63 = vunpack.c.l.b16 %v30
  %v64 = vunpack.c.l.b16 %v31
  %v65 = vunpack.c.l.b16 %v32
  %v66 = vunpack.c.l.b16 %v33
  %v67 = vunpack.c.l.b16 %v34
  %v68 = vunpack.c.l.b16 %v35
  %v69 = vunpack.c.l.b16 %v36
  %v70 = vunpack.c.l.b16 %v37
  %v71 = vunpack.c.l.b16 %v38
  %v72 = vunpack.c.l.b16 %v39
  %v73 = vunpack.c.l.b16 %v40
  %v74 = vpack.c.b16 %v62, %v61
  %v75 = vpack.c.b16 %v64, %v63
  %v76 = vpack.c.b16 %v66, %v65
  %v77 = vpack.c.b16 %v68, %v67
  %v78 = vpack.c.b16 %v70, %v69
  %v79 = vpack.c.b16 %v72, %v71
  %v80 = vpack.c.b16 %v73, %v73
  %vm87 = vcmask 818176
  %v89 = vsel %vm87, %v27, 0
  %vm91 = vcmask 1041408
  %v93 = vsel %vm91, %v80, 0
  %95 = vmatprep.subr.bf16.mxu0 0
  %96 = vmatpush1.bf16.msra.mxu0 %v74
  %97 = vmatprep.subr.bf16.mxu0 0
  %98 = vmatpush1.bf16.msra.mxu0 %v75
  %99 = vmatprep.subr.bf16.mxu0 0
  %100 = vmatpush1.bf16.msra.mxu0 %v76
  %101 = vmatprep.subr.bf16.mxu0 0
  %102 = vmatpush1.bf16.msra.mxu0 %v77
  %103 = vmatprep.subr.bf16.mxu0 0
  %104 = vmatpush1.bf16.msra.mxu0 %v78
  %105 = vmatprep.subr.bf16.mxu0 0
  %106 = vmatpush1.bf16.msra.mxu0 %v79
  %107 = vmatprep.subr.bf16.mxu0 0
  %108 = vmatpush1.bf16.msra.mxu0 %v93
  %109 = vmatprep.subr.bf16.mxu0 0
  %110 = vmatpush1.bf16.msra.mxu0 0
  %111 = vmatprep.subr.bf16.mxu0 0
  %112 = vmatpush1.bf16.msra.mxu0 0
  %113 = vmatprep.subr.bf16.mxu0 0
  %114 = vmatpush1.bf16.msra.mxu0 0
  %115 = vmatprep.subr.bf16.mxu0 0
  %116 = vmatpush1.bf16.msra.mxu0 0
  %117 = vmatprep.subr.bf16.mxu0 0
  %118 = vmatpush1.bf16.msra.mxu0 0
  %119 = vmatprep.subr.bf16.mxu0 0
  %120 = vmatpush1.bf16.msra.mxu0 0
  %121 = vmatprep.subr.bf16.mxu0 0
  %122 = vmatpush1.bf16.msra.mxu0 0
  %123 = vmatprep.subr.bf16.mxu0 0
  %124 = vmatpush1.bf16.msra.mxu0 0
  %125 = vmatprep.subr.bf16.mxu0 0
  %126 = vmatpush1.bf16.msra.mxu0 0
  %127 = vmatprep.mubr.bf16.mxu0 0
  %128 = vmatmul.mubr.bf16.gmra.mrb[0].mxu0 %v89
  %v129 = vpop.f32.mrb[0].mxu0
  %v130 = vadd.f32 %v46, %v129
  %v131 = vpop.f32.mrb[0].mxu0
  %v132 = vpop.f32.mrb[0].mxu0
  %v133 = vpop.f32.mrb[0].mxu0
  %134 = vdwg.mxu0
  %v135 = vmax.f32 %v130, 0.0
  %v136 = vpack.c.bf16 %v135, %v135
  %v137 = vld [vmem:[%s3] sm:$0xf]
  %v138 = vld [vmem:[%s3 + $0x4] sm:$0xf]
  %v139 = vld [vmem:[%s3 + $0x8] sm:$0xf]
  %v140 = vld [vmem:[%s3 + $0xc] sm:$0xf]
  %v141 = vld [vmem:[%s3 + $0x10] sm:$0xf]
  %v142 = vld [vmem:[%s3 + $0x14] sm:$0xf]
  %v143 = vld [vmem:[%s3 + $0x18] sm:$0xf]
  %v144 = vld [vmem:[%s3 + $0x1c] sm:$0xf]
  %v145 = vld [vmem:[%s3 + $0x20] sm:$0xf]
  %v146 = vld [vmem:[%s3 + $0x24] sm:$0xf]
  %v147 = vld [vmem:[%s3 + $0x28] sm:$0xf]
  %v148 = vld [vmem:[%s3 + $0x2c] sm:$0xf]
  %v149 = vld [vmem:[%s3 + $0x30] sm:$0xf]
  %v150 = vld [vmem:[%s3 + $0x34] sm:$0xf]
  %v151 = vld [vmem:[%s3 + $0x38] sm:$0xf]
  %v152 = vld [vmem:[%s3 + $0x3c] sm:$0xf]
  %v153 = vld [vmem:[%s4] sm:$0x1]
  %v155 = vlaneseq
  %v156 = vshrl.u32 %v155, 7
  %v157 = vsub.s32 0, %v156
  %v158 = vrot.slane %v153, %v157
  %v176 = vunpack.c.l.b16 %v137
  %v177 = vunpack.c.l.b16 %v138
  %v178 = vunpack.c.l.b16 %v139
  %v179 = vunpack.c.l.b16 %v140
  %v180 = vunpack.c.l.b16 %v141
  %v181 = vunpack.c.l.b16 %v142
  %v182 = vunpack.c.l.b16 %v143
  %v183 = vunpack.c.l.b16 %v144
  %v184 = vunpack.c.l.b16 %v145
  %v185 = vunpack.c.l.b16 %v146
  %v186 = vunpack.c.l.b16 %v147
  %v187 = vunpack.c.l.b16 %v148
  %v188 = vunpack.c.l.b16 %v149
  %v189 = vunpack.c.l.b16 %v150
  %v190 = vunpack.c.l.b16 %v151
  %v191 = vunpack.c.l.b16 %v152
  %v192 = vpack.c.b16 %v177, %v176
  %v193 = vpack.c.b16 %v179, %v178
  %v194 = vpack.c.b16 %v181, %v180
  %v195 = vpack.c.b16 %v183, %v182
  %v196 = vpack.c.b16 %v185, %v184
  %v197 = vpack.c.b16 %v187, %v186
  %v198 = vpack.c.b16 %v189, %v188
  %v199 = vpack.c.b16 %v191, %v190
  %208 = vmatprep.subr.bf16.mxu0 0
  %209 = vmatpush1.bf16.msra.mxu0 %v192
  %210 = vmatprep.subr.bf16.mxu0 0
  %211 = vmatpush1.bf16.msra.mxu0 %v193
  %212 = vmatprep.subr.bf16.mxu0 0
  %213 = vmatpush1.bf16.msra.mxu0 %v194
  %214 = vmatprep.subr.bf16.mxu0 0
  %215 = vmatpush1.bf16.msra.mxu0 %v195
  %216 = vmatprep.subr.bf16.mxu0 0
  %217 = vmatpush1.bf16.msra.mxu0 %v196
  %218 = vmatprep.subr.bf16.mxu0 0
  %219 = vmatpush1.bf16.msra.mxu0 %v197
  %220 = vmatprep.subr.bf16.mxu0 0
  %221 = vmatpush1.bf16.msra.mxu0 %v198
  %222 = vmatprep.subr.bf16.mxu0 0
  %223 = vmatpush1.bf16.msra.mxu0 %v199
  %224 = vmatprep.subr.bf16.mxu0 0
  %225 = vmatpush1.bf16.msra.mxu0 0
  %226 = vmatprep.subr.bf16.mxu0 0
  %227 = vmatpush1.bf16.msra.mxu0 0
  %228 = vmatprep.subr.bf16.mxu0 0
  %229 = vmatpush1.bf16.msra.mxu0 0
  %230 = vmatprep.subr.bf16.mxu0 0
  %231 = vmatpush1.bf16.msra.mxu0 0
  %232 = vmatprep.subr.bf16.mxu0 0
  %233 = vmatpush1.bf16.msra.mxu0 0
  %234 = vmatprep.subr.bf16.mxu0 0
  %235 = vmatpush1.bf16.msra.mxu0 0
  %236 = vmatprep.subr.bf16.mxu0 0
  %237 = vmatpush1.bf16.msra.mxu0 0
  %238 = vmatprep.subr.bf16.mxu0 0
  %239 = vmatpush1.bf16.msra.mxu0 0
  %240 = vmatprep.mubr.bf16.mxu0 0
  %241 = vmatmul.mubr.bf16.gmra.mrb[0].mxu0 %v136
  %v242 = vpop.f32.mrb[0].mxu0
  %v243 = vadd.f32 %v158, %v242
  %v244 = vpop.f32.mrb[0].mxu0
  %v245 = vpop.f32.mrb[0].mxu0
  %v246 = vpop.f32.mrb[0].mxu0
  %247 = vdwg.mxu0
  %v248 = vmax.f32 %v243, 0.0
  %v249 = vpack.c.bf16 %v248, %v248
  %v250 = vld [vmem:[%s5] sm:$0xf]
  %v251 = vld [vmem:[%s5 + $0x4] sm:$0xf]
  %v252 = vld [vmem:[%s5 + $0x8] sm:$0xf]
  %v253 = vld [vmem:[%s5 + $0xc] sm:$0xf]
  %v254 = vld [vmem:[%s5 + $0x10] sm:$0xf]
  %v255 = vld [vmem:[%s5 + $0x14] sm:$0xf]
  %v256 = vld [vmem:[%s5 + $0x18] sm:$0xf]
  %v257 = vld [vmem:[%s5 + $0x1c] sm:$0xf]
  %v258 = vld [vmem:[%s6] sm:$0x1]
  %v260 = vlaneseq
  %v261 = vshrl.u32 %v260, 7
  %v262 = vsub.s32 0, %v261
  %v263 = vrot.slane %v258, %v262
  %v273 = vunpack.c.l.b16 %v250
  %v274 = vunpack.c.l.b16 %v251
  %v275 = vunpack.c.l.b16 %v252
  %v276 = vunpack.c.l.b16 %v253
  %v277 = vunpack.c.l.b16 %v254
  %v278 = vunpack.c.l.b16 %v255
  %v279 = vunpack.c.l.b16 %v256
  %v280 = vunpack.c.l.b16 %v257
  %v281 = vpack.c.b16 %v274, %v273
  %v282 = vpack.c.b16 %v276, %v275
  %v283 = vpack.c.b16 %v278, %v277
  %v284 = vpack.c.b16 %v280, %v279
  %vm289 = vcmask 523264
  %v291 = vsel %vm289, %v249, 0
  %293 = vmatprep.subr.bf16.mxu0 0
  %294 = vmatpush1.bf16.msra.mxu0 %v281
  %295 = vmatprep.subr.bf16.mxu0 0
  %296 = vmatpush1.bf16.msra.mxu0 %v282
  %297 = vmatprep.subr.bf16.mxu0 0
  %298 = vmatpush1.bf16.msra.mxu0 %v283
  %299 = vmatprep.subr.bf16.mxu0 0
  %300 = vmatpush1.bf16.msra.mxu0 %v284
  %301 = vmatprep.subr.bf16.mxu0 0
  %302 = vmatpush1.bf16.msra.mxu0 0
  %303 = vmatprep.subr.bf16.mxu0 0
  %304 = vmatpush1.bf16.msra.mxu0 0
  %305 = vmatprep.subr.bf16.mxu0 0
  %306 = vmatpush1.bf16.msra.mxu0 0
  %307 = vmatprep.subr.bf16.mxu0 0
  %308 = vmatpush1.bf16.msra.mxu0 0
  %309 = vmatprep.subr.bf16.mxu0 0
  %310 = vmatpush1.bf16.msra.mxu0 0
  %311 = vmatprep.subr.bf16.mxu0 0
  %312 = vmatpush1.bf16.msra.mxu0 0
  %313 = vmatprep.subr.bf16.mxu0 0
  %314 = vmatpush1.bf16.msra.mxu0 0
  %315 = vmatprep.subr.bf16.mxu0 0
  %316 = vmatpush1.bf16.msra.mxu0 0
  %317 = vmatprep.subr.bf16.mxu0 0
  %318 = vmatpush1.bf16.msra.mxu0 0
  %319 = vmatprep.subr.bf16.mxu0 0
  %320 = vmatpush1.bf16.msra.mxu0 0
  %321 = vmatprep.subr.bf16.mxu0 0
  %322 = vmatpush1.bf16.msra.mxu0 0
  %323 = vmatprep.subr.bf16.mxu0 0
  %324 = vmatpush1.bf16.msra.mxu0 0
  %325 = vmatprep.mubr.bf16.mxu0 0
  %326 = vmatmul.mubr.bf16.gmra.mrb[0].mxu0 %v291
  %v327 = vpop.f32.mrb[0].mxu0
  %v328 = vadd.f32 %v263, %v327
  %v329 = vpop.f32.mrb[0].mxu0
  %v330 = vpop.f32.mrb[0].mxu0
  %v331 = vpop.f32.mrb[0].mxu0
  %332 = vdwg.mxu0
  %vm333 = vcmask 31744
  %334 = vst.msk [vmem:[%s7] sm:$0xff] %vm333, %v328
  // Predicated region
  $region30: #{tpu_custom_call.1} parent=0 // pred_check
    _
  $region31: #{tpu_custom_call.1} parent=0 // pred_check_branch
    %336 = sbr.rel (0) target = $region33
  $region32: #{tpu_custom_call.1} parent=0 // pred_region
    _
  $region33: #{tpu_custom_call.1} parent=0 // pred_fallthru
    _
  // Predicated region
  $region34: #{tpu_custom_call.1} parent=0 // pred_check
    _
  $region35: #{tpu_custom_call.1} parent=0 // pred_check_branch
    %338 = sbr.rel (0) target = $region37
  $region36: #{tpu_custom_call.1} parent=0 // pred_region
    _
  $region37: #{tpu_custom_call.1} parent=0 // pred_fallthru
    _

</llo_original>
